<compile_context>
chip_gen: v7x
topology: tpu7x:2x2x1
jax: 0.10.0
libtpu: 0.0.40
codegen_flags: <defaults>
</compile_context>

<pallas_src>
import functools

import jax
import jax.numpy as jnp
from jax.experimental import pallas as pl
from jax.experimental.pallas import tpu as pltpu


def _round_up(x: int, m: int) -> int:
    return ((x + m - 1) // m) * m


def _pick_tile(dim: int, align: int, cap: int) -> int:
    """Largest multiple of `align` that divides `dim` and is <= cap.

    `dim` is already a multiple of `align`, so no padding beyond hardware
    granularity is ever introduced by the tile choice (no wasted MACs/DMA).
    """
    if dim <= cap:
        return dim
    best = align
    t = align
    while t <= cap:
        if dim % t == 0:
            best = t
        t += align
    return best


# --------------------------------------------------------------------------
# Kernels
# --------------------------------------------------------------------------
def _dense_single_kernel(x_ref, w_ref, b_ref, o_ref, *, activation: str):
    # One-shot: whole (padded) problem is resident.  bf16 x bf16 -> f32.
    acc = jnp.dot(x_ref[...], w_ref[...], preferred_element_type=jnp.float32)
    acc = acc + b_ref[...]                      # f32 bias, broadcast over rows
    if activation == "tanh":
        acc = jnp.tanh(acc)                     # EUP
    else:
        acc = jnp.maximum(acc, 0.0)             # VPU
    o_ref[...] = acc.astype(o_ref.dtype)


def _dense_tiled_kernel(x_ref, w_ref, b_ref, o_ref, acc_ref, *, activation: str):
    # x_ref: [tm, tk] bf16   w_ref: [tk, tn] bf16 (already [K, N] layout)
    # b_ref: [1, tn] f32     o_ref: [tm, tn]      acc_ref: [tm, tn] f32
    k = pl.program_id(2)

    @pl.when(k == 0)
    def _():
        acc_ref[...] = jnp.zeros_like(acc_ref)

    acc_ref[...] += jnp.dot(x_ref[...], w_ref[...],
                            preferred_element_type=jnp.float32)

    @pl.when(k == pl.num_programs(2) - 1)
    def _():
        acc = acc_ref[...] + b_ref[...]
        if activation == "tanh":
            acc = jnp.tanh(acc)
        else:
            acc = jnp.maximum(acc, 0.0)
        o_ref[...] = acc.astype(o_ref.dtype)


# --------------------------------------------------------------------------
# Wrappers
# --------------------------------------------------------------------------
def prepare_dense_params(weight, bias, *, compute_dtype=jnp.bfloat16):
    """One-time weight/bias layout: PyTorch [out,in] -> padded [K,N] bf16.

    Hoist this out of the hot path in a real model (call once, reuse every
    forward) so the kernel never pays an extra HBM pass for pad/transpose/cast.
    """
    N, K = weight.shape
    assert bias.shape == (N,)
    N_pad = _round_up(N, 128)
    K_pad = _round_up(K, 128)
    w_kn = jnp.pad(weight.T, ((0, K_pad - K), (0, N_pad - N))).astype(compute_dtype)
    b2 = jnp.pad(bias.astype(jnp.float32), (0, N_pad - N)).reshape(1, N_pad)
    return w_kn, b2


def dense_block_apply(x, w_kn, b2, out_features, activation="relu", *,
                      compute_dtype=jnp.bfloat16,
                      tm_max=512, tn_max=1024, tk_max=1024):
    """act(x @ W.T + b) using pre-laid-out params from prepare_dense_params."""
    activation = activation.lower()
    assert activation in ("tanh", "relu")
    B, K = x.shape
    K_pad, N_pad = w_kn.shape
    assert K <= K_pad
    out_dtype = x.dtype

    # Pad batch to 16 (bf16 sublane packing) and K to the prepared K_pad; cast
    # activations to the MXU compute dtype.  K zero-padding contributes 0.
    M_pad = _round_up(B, 16)
    x_p = jnp.pad(x, ((0, M_pad - B), (0, K_pad - K))).astype(compute_dtype)

    tm = _pick_tile(M_pad, 16, tm_max)
    tn = _pick_tile(N_pad, 128, tn_max)
    tk = _pick_tile(K_pad, 128, tk_max)
    gm, gn, gk = M_pad // tm, N_pad // tn, K_pad // tk

    itemsize_c = jnp.dtype(compute_dtype).itemsize
    itemsize_o = jnp.dtype(out_dtype).itemsize
    flops = 2 * M_pad * N_pad * K_pad
    transcendentals = M_pad * N_pad if activation == "tanh" else 0
    bytes_accessed = (M_pad * K_pad * itemsize_c + K_pad * N_pad * itemsize_c
                      + N_pad * 4 + M_pad * N_pad * itemsize_o)
    cost = pl.CostEstimate(flops=flops, transcendentals=transcendentals,
                           bytes_accessed=bytes_accessed)

    # ---------------- Fast path: whole problem in one resident block ----------
    if gm == 1 and gn == 1 and gk == 1:
        kernel = functools.partial(_dense_single_kernel, activation=activation)
        out_p = pl.pallas_call(
            kernel,
            out_shape=jax.ShapeDtypeStruct((M_pad, N_pad), out_dtype),
            grid=(1,),
            in_specs=[
                pl.BlockSpec((M_pad, K_pad), lambda i: (0, 0)),
                pl.BlockSpec((K_pad, N_pad), lambda i: (0, 0)),
                pl.BlockSpec((1, N_pad), lambda i: (0, 0)),
            ],
            out_specs=pl.BlockSpec((M_pad, N_pad), lambda i: (0, 0)),
            cost_estimate=cost,
        )(x_p, w_kn, b2)
        return out_p[:B, :out_features]

    # ---------------- Tiled path ----------------------------------------------
    # v7x megacore: if only the K (reduction) axis has >1 step, split N so a
    # "parallel" axis has >= 2 tiles and both TensorCores get work.
    if gm == 1 and gn == 1 and gk > 1 and N_pad >= 256:
        tn = _pick_tile(N_pad, 128, max(128, tn // 2))
        gn = N_pad // tn

    # VMEM budget: double-buffered x/w/out tiles + f32 accumulator + bias,
    # with generous margin; capped well under v7x's 64 MiB physical VMEM.
    vmem_est = (2 * (tm * tk + tk * tn) * itemsize_c
                + 2 * tm * tn * itemsize_o
                + tm * tn * 4 + 2 * tn * 4)
    vmem_limit = int(min(48 * 1024 * 1024, vmem_est + 16 * 1024 * 1024))

    kernel = functools.partial(_dense_tiled_kernel, activation=activation)
    out_p = pl.pallas_call(
        kernel,
        out_shape=jax.ShapeDtypeStruct((M_pad, N_pad), out_dtype),
        grid_spec=pltpu.PrefetchScalarGridSpec(
            num_scalar_prefetch=0,
            grid=(gm, gn, gk),
            in_specs=[
                pl.BlockSpec((tm, tk), lambda i, j, k: (i, k)),   # x  (bf16)
                pl.BlockSpec((tk, tn), lambda i, j, k: (k, j)),   # W  ([K,N] bf16)
                pl.BlockSpec((1, tn), lambda i, j, k: (0, j)),    # bias (f32)
            ],
            out_specs=pl.BlockSpec((tm, tn), lambda i, j, k: (i, j)),
            scratch_shapes=[pltpu.VMEM((tm, tn), jnp.float32)],
        ),
        compiler_params=pltpu.CompilerParams(
            dimension_semantics=("parallel", "parallel", "arbitrary"),
            vmem_limit_bytes=vmem_limit,
        ),
        cost_estimate=cost,
    )(x_p, w_kn, b2)
    return out_p[:B, :out_features]


def dense_block(x, weight, bias, activation: str = "relu", **kwargs):
    """Pallas equivalent of DenseBlock.forward: act(x @ weight.T + bias).

    x:      [B, in_chans]         (float32)
    weight: [out_chans, in_chans] (PyTorch nn.Linear layout)
    bias:   [out_chans]
    """
    w_kn, b2 = prepare_dense_params(weight, bias)
    return dense_block_apply(x, w_kn, b2, weight.shape[0], activation, **kwargs)


# --------------------------------------------------------------------------
# Reference + test
# --------------------------------------------------------------------------
def _reference(x, weight, bias, activation, compute_dtype=jnp.bfloat16):
    # Same numerics as the kernel: bf16 operands, f32 accumulation, f32 epilogue.
    y = jnp.dot(x.astype(compute_dtype), weight.astype(compute_dtype).T,
                preferred_element_type=jnp.float32) + bias.astype(jnp.float32)
    return jnp.tanh(y) if activation == "tanh" else jnp.maximum(y, 0.0)


def _make_params(key, in_chans, out_chans):
    k_w, k_b = jax.random.split(key)
    bound = 1.0 / (in_chans ** 0.5)
    weight = jax.random.uniform(
        k_w, (out_chans, in_chans), dtype=jnp.float32, minval=-bound, maxval=bound)
    bias = jax.random.uniform(
        k_b, (out_chans,), dtype=jnp.float32, minval=-bound, maxval=bound)
    return weight, bias


if __name__ == "__main__":
    key = jax.random.PRNGKey(0)
    ok = True

    # (batch, in_chans, out_chans):
    #   - small module-spec-like case and a ragged case -> single-block fast path
    #   - larger case -> tiled path (grid (2,1,2)) exercising the f32 accumulator
    #     and the final-K epilogue.
    cases = [(8, 32, 64), (40, 640, 300), (768, 1280, 256)]

    for B, cin, cout in cases:
        key, k_x, k_p = jax.random.split(key, 3)
        x = jax.random.normal(k_x, (B, cin), dtype=jnp.float32)
        weight, bias = _make_params(k_p, cin, cout)
        # Weight layout/pad/cast done once per layer, reused for both activations.
        w_kn, b2 = prepare_dense_params(weight, bias)
        for act in ("relu", "tanh"):
            out = dense_block_apply(x, w_kn, b2, cout, activation=act)
            out = jax.block_until_ready(out)
            ref = _reference(x, weight, bias, act)
            case_ok = bool(jnp.allclose(out, ref, atol=2e-4, rtol=2e-4))
            if not case_ok:
                err = float(jnp.max(jnp.abs(out - ref)))
                print(f"MISMATCH case={(B, cin, cout)} act={act} max_abs_err={err}")
            ok = ok and case_ok

    if ok:
        print("KERNEL_OK")
</pallas_src>

<mosaic_0001>
module attributes {stable_mosaic.version = 11 : i64} {
  func.func @_dense_single_kernel(%arg0: i32, %arg1: memref<16x128xbf16, #tpu.memory_space<vmem>>, %arg2: memref<128x128xbf16, #tpu.memory_space<vmem>>, %arg3: memref<1x128xf32, #tpu.memory_space<vmem>>, %arg4: memref<16x128xf32, #tpu.memory_space<vmem>>) attributes {dimension_semantics = [#tpu.dimension_semantics<arbitrary>], iteration_bounds = array<i64: 1>, scalar_prefetch = 0 : i64, scratch_operands = 0 : i64, tpu.core_type = #tpu.core_type<tc>, window_params = [{pipeline_mode = #tpu.pipeline_mode<synchronous>, transform_indices = @transform_0, window_bounds = array<i64: 16, 128>}, {pipeline_mode = #tpu.pipeline_mode<synchronous>, transform_indices = @transform_1, window_bounds = array<i64: 128, 128>}, {pipeline_mode = #tpu.pipeline_mode<synchronous>, transform_indices = @transform_2, window_bounds = array<i64: 1, 128>}, {pipeline_mode = #tpu.pipeline_mode<synchronous>, transform_indices = @transform_3, window_bounds = array<i64: 16, 128>}]} {
    %c0 = arith.constant 0 : index
    %c0_0 = arith.constant 0 : index
    %0 = vector.load %arg1[%c0, %c0_0] : memref<16x128xbf16, #tpu.memory_space<vmem>>, vector<16x128xbf16>
    %c0_1 = arith.constant 0 : index
    %c0_2 = arith.constant 0 : index
    %1 = vector.load %arg2[%c0_1, %c0_2] : memref<128x128xbf16, #tpu.memory_space<vmem>>, vector<128x128xbf16>
    %cst = arith.constant dense<0.000000e+00> : vector<16x128xf32>
    %2 = tpu.matmul %0, %1, %cst {dimension_numbers = #tpu.dot_dimension_numbers<[1], [0], [0], [1], [0, 0, 1, 1], [], []>} : vector<16x128xbf16>, vector<128x128xbf16>, vector<16x128xf32> -> vector<16x128xf32>
    %c0_3 = arith.constant 0 : index
    %c0_4 = arith.constant 0 : index
    %3 = vector.load %arg3[%c0_3, %c0_4] : memref<1x128xf32, #tpu.memory_space<vmem>>, vector<1x128xf32>
    %4 = vector.broadcast %3 : vector<1x128xf32> to vector<16x128xf32>
    %5 = arith.addf %2, %4 : vector<16x128xf32>
    %cst_5 = arith.constant 0.000000e+00 : f32
    %6 = vector.broadcast %cst_5 : f32 to vector<16x128xf32>
    %7 = arith.maximumf %5, %6 : vector<16x128xf32>
    %c0_6 = arith.constant 0 : index
    %c0_7 = arith.constant 0 : index
    %8 = vector.load %arg4[%c0_6, %c0_7] : memref<16x128xf32, #tpu.memory_space<vmem>>, vector<16x128xf32>
    tpu.vector_store %arg4[%c0_6, %c0_7], %7 {strides = array<i32>} : memref<16x128xf32, #tpu.memory_space<vmem>>, vector<16x128xf32>,
    return
  }
  func.func @transform_0(%arg0: i32) -> (i32, i32) {
    %c0_i32 = arith.constant 0 : i32
    %c0_i32_0 = arith.constant 0 : i32
    %c0_i32_1 = arith.constant 0 : i32
    return %c0_i32, %c0_i32_0 : i32, i32
  }
  func.func @transform_1(%arg0: i32) -> (i32, i32) {
    %c0_i32 = arith.constant 0 : i32
    %c0_i32_0 = arith.constant 0 : i32
    %c0_i32_1 = arith.constant 0 : i32
    return %c0_i32, %c0_i32_0 : i32, i32
  }
  func.func @transform_2(%arg0: i32) -> (i32, i32) {
    %c0_i32 = arith.constant 0 : i32
    %c0_i32_0 = arith.constant 0 : i32
    %c0_i32_1 = arith.constant 0 : i32
    return %c0_i32, %c0_i32_0 : i32, i32
  }
  func.func @transform_3(%arg0: i32) -> (i32, i32) {
    %c0_i32 = arith.constant 0 : i32
    %c0_i32_0 = arith.constant 0 : i32
    %c0_i32_1 = arith.constant 0 : i32
    return %c0_i32, %c0_i32_0 : i32, i32
  }
}

</mosaic_0001>

<llo_original>
// kernel: tpu_custom_call.1
$region0: #{tpu_custom_call.1}
  #allocation0 [shape = 'u32[]', space=smem, size = 0x4, offset = 0x4, fixed_abs, tag = 'smem constant byte address 0x4 - core index']
  #allocation1 [shape = 'u32[144,128]{1,0:T(1,128)}', space=vmem, size = 0x12000, scoped, tag = 'internal scratch']
  %s0 = inlined_call_operand.hbm [shape: bf16[16,128], index: 0, kind: input, shape index: {}]
  %s1 = inlined_call_operand.hbm [shape: bf16[128,128], index: 1, kind: input, shape index: {}]
  %s2 = inlined_call_operand.vmem [shape: f32[1,128], index: 2, kind: input, shape index: {}]
  %s3 = inlined_call_operand.hbm [shape: f32[16,128], index: 3, kind: output, shape index: {}]
  %s4 = sld [smem:[#allocation0]]
  $region30: #{tpu_custom_call.1} parent=0
    _
  %s6 = ssub.s32 1, %s4
  %s7 = scalar_select 0, %s6, %s4
  $region1: #{tpu_custom_call.1} parent=0
    #allocation2 [shape = 'u8[4096]{0}', space=vmem, size = 0x1000, scoped, tag = 'input window, operand 0, single buffered']
    #allocation3 [shape = 's32[1]{0}', space=sflag, size = 0x4, scoped, tag = 'scoped memory for tpu_custom_call.1']
    #allocation4 [shape = 's32[1]{0}', space=sflag, size = 0x4, scoped, tag = 'scoped memory for tpu_custom_call.1']
    #allocation5 [shape = 'u8[32768]{0}', space=vmem, size = 0x8000, scoped, tag = 'input window, operand 1, single buffered']
    #allocation6 [shape = 's32[1]{0}', space=sflag, size = 0x4, scoped, tag = 'scoped memory for tpu_custom_call.1']
    #allocation7 [shape = 'u8[8192]{0}', space=vmem, size = 0x2000, scoped, tag = 'output window, operand 0, single buffered']
    %8 = vsyncpa [#allocation3], 0
    %9 = vsyncpa [#allocation6], 0
    %10 = vsyncpa [#allocation4], 0
    // Predicated region
    $region2: #{tpu_custom_call.1} parent=1 // pred_check
      _
    $region3: #{tpu_custom_call.1} parent=1 // pred_check_branch
      %12 = sbr.rel (0) target = $region5
    $region4: #{tpu_custom_call.1} parent=1 // pred_region
      %s14 = ssub.s32 128, 128
      %15 = vsyncadd [#allocation3], %s14
      %s16 = sshll.u32 [#allocation2], 4
      %s17 = int_to_ptr.vmem [resolvable:$true] %s16
      %22 = dma.hbm_to_vmem [thread:$0]  %s0, 128, %s17, [#allocation3], 64, 64, 4
    $region5: #{tpu_custom_call.1} parent=1 // pred_fallthru
      _
    // Predicated region
    $region6: #{tpu_custom_call.1} parent=1 // pred_check
      _
    $region7: #{tpu_custom_call.1} parent=1 // pred_check_branch
      %24 = sbr.rel (0) target = $region9
    $region8: #{tpu_custom_call.1} parent=1 // pred_region
      %s26 = ssub.s32 1024, 1024
      %27 = vsyncadd [#allocation6], %s26
      %s28 = sshll.u32 [#allocation5], 4
      %s29 = int_to_ptr.vmem [resolvable:$true] %s28
      %34 = dma.hbm_to_vmem [thread:$0]  %s1, 1024, %s29, [#allocation6], 64, 64, 4
    $region9: #{tpu_custom_call.1} parent=1 // pred_fallthru
      _
    // Predicated region
    $region10: #{tpu_custom_call.1} parent=1 // pred_check
      _
    $region11: #{tpu_custom_call.1} parent=1 // pred_check_branch
      %36 = sbr.rel (0) target = $region13
    $region12: #{tpu_custom_call.1} parent=1 // pred_region
      _
    $region13: #{tpu_custom_call.1} parent=1 // pred_fallthru
      _
    // Predicated region
    $region14: #{tpu_custom_call.1} parent=1 // pred_check
      _
    $region15: #{tpu_custom_call.1} parent=1 // pred_check_branch
      %38 = sbr.rel (0) target = $region17
    $region16: #{tpu_custom_call.1} parent=1 // pred_region
      %39 = dma.done [#allocation3], 128
    $region17: #{tpu_custom_call.1} parent=1 // pred_fallthru
      _
    // Predicated region
    $region18: #{tpu_custom_call.1} parent=1 // pred_check
      _
    $region19: #{tpu_custom_call.1} parent=1 // pred_check_branch
      %41 = sbr.rel (0) target = $region21
    $region20: #{tpu_custom_call.1} parent=1 // pred_region
      %42 = dma.done [#allocation6], 1024
    $region21: #{tpu_custom_call.1} parent=1 // pred_fallthru
      _
    %v44 = vld [vmem:[#allocation2] sm:$0xf]
    %v45 = vld [vmem:[#allocation2 + $0x4] sm:$0xf]
    %v46 = vld [vmem:[#allocation5] sm:$0xf]
    %v47 = vld [vmem:[#allocation5 + $0x4] sm:$0xf]
    %v48 = vld [vmem:[#allocation5 + $0x8] sm:$0xf]
    %v49 = vld [vmem:[#allocation5 + $0xc] sm:$0xf]
    %v50 = vld [vmem:[#allocation5 + $0x10] sm:$0xf]
    %v51 = vld [vmem:[#allocation5 + $0x14] sm:$0xf]
    %v52 = vld [vmem:[#allocation5 + $0x18] sm:$0xf]
    %v53 = vld [vmem:[#allocation5 + $0x1c] sm:$0xf]
    %v54 = vld [vmem:[#allocation5 + $0x20] sm:$0xf]
    %v55 = vld [vmem:[#allocation5 + $0x24] sm:$0xf]
    %v56 = vld [vmem:[#allocation5 + $0x28] sm:$0xf]
    %v57 = vld [vmem:[#allocation5 + $0x2c] sm:$0xf]
    %v58 = vld [vmem:[#allocation5 + $0x30] sm:$0xf]
    %v59 = vld [vmem:[#allocation5 + $0x34] sm:$0xf]
    %v60 = vld [vmem:[#allocation5 + $0x38] sm:$0xf]
    %v61 = vld [vmem:[#allocation5 + $0x3c] sm:$0xf]
    %v62 = vld [vmem:[%s2] sm:$0x1]
    %v64 = vlaneseq
    %v65 = vshrl.u32 %v64, 7
    %v66 = vsub.s32 0, %v65
    %v67 = vrot.slane %v62, %v66
    %v71 = vunpack.c.l.b16 %v44
    %v72 = vunpack.c.l.b16 %v45
    %v73 = vpack.c.b16 %v72, %v71
    %v91 = vunpack.c.l.b16 %v46
    %v92 = vunpack.c.l.b16 %v47
    %v93 = vunpack.c.l.b16 %v48
    %v94 = vunpack.c.l.b16 %v49
    %v95 = vunpack.c.l.b16 %v50
    %v96 = vunpack.c.l.b16 %v51
    %v97 = vunpack.c.l.b16 %v52
    %v98 = vunpack.c.l.b16 %v53
    %v99 = vunpack.c.l.b16 %v54
    %v100 = vunpack.c.l.b16 %v55
    %v101 = vunpack.c.l.b16 %v56
    %v102 = vunpack.c.l.b16 %v57
    %v103 = vunpack.c.l.b16 %v58
    %v104 = vunpack.c.l.b16 %v59
    %v105 = vunpack.c.l.b16 %v60
    %v106 = vunpack.c.l.b16 %v61
    %v107 = vpack.c.b16 %v92, %v91
    %v108 = vpack.c.b16 %v94, %v93
    %v109 = vpack.c.b16 %v96, %v95
    %v110 = vpack.c.b16 %v98, %v97
    %v111 = vpack.c.b16 %v100, %v99
    %v112 = vpack.c.b16 %v102, %v101
    %v113 = vpack.c.b16 %v104, %v103
    %v114 = vpack.c.b16 %v106, %v105
    %123 = vmatprep.subr.bf16.mxu0 0
    %124 = vmatpush1.bf16.msra.mxu0 %v107
    %125 = vmatprep.subr.bf16.mxu0 0
    %126 = vmatpush1.bf16.msra.mxu0 %v108
    %127 = vmatprep.subr.bf16.mxu0 0
    %128 = vmatpush1.bf16.msra.mxu0 %v109
    %129 = vmatprep.subr.bf16.mxu0 0
    %130 = vmatpush1.bf16.msra.mxu0 %v110
    %131 = vmatprep.subr.bf16.mxu0 0
    %132 = vmatpush1.bf16.msra.mxu0 %v111
    %133 = vmatprep.subr.bf16.mxu0 0
    %134 = vmatpush1.bf16.msra.mxu0 %v112
    %135 = vmatprep.subr.bf16.mxu0 0
    %136 = vmatpush1.bf16.msra.mxu0 %v113
    %137 = vmatprep.subr.bf16.mxu0 0
    %138 = vmatpush1.bf16.msra.mxu0 %v114
    %139 = vmatprep.subr.bf16.mxu0 0
    %140 = vmatpush1.bf16.msra.mxu0 0
    %141 = vmatprep.subr.bf16.mxu0 0
    %142 = vmatpush1.bf16.msra.mxu0 0
    %143 = vmatprep.subr.bf16.mxu0 0
    %144 = vmatpush1.bf16.msra.mxu0 0
    %145 = vmatprep.subr.bf16.mxu0 0
    %146 = vmatpush1.bf16.msra.mxu0 0
    %147 = vmatprep.subr.bf16.mxu0 0
    %148 = vmatpush1.bf16.msra.mxu0 0
    %149 = vmatprep.subr.bf16.mxu0 0
    %150 = vmatpush1.bf16.msra.mxu0 0
    %151 = vmatprep.subr.bf16.mxu0 0
    %152 = vmatpush1.bf16.msra.mxu0 0
    %153 = vmatprep.subr.bf16.mxu0 0
    %154 = vmatpush1.bf16.msra.mxu0 0
    %155 = vmatprep.mubr.bf16.mxu0 0
    %156 = vmatmul.mubr.bf16.gmra.mrb[0].mxu0 %v73
    %v157 = vpop.f32.mrb[0].mxu0
    %v158 = vadd.f32 %v67, %v157
    %v159 = vpop.f32.mrb[0].mxu0
    %v160 = vpop.f32.mrb[0].mxu0
    %v161 = vadd.f32 %v67, %v160
    %v162 = vpop.f32.mrb[0].mxu0
    %163 = vdwg.mxu0
    %v164 = vmax.f32 %v158, 0.0
    %v165 = vmax.f32 %v161, 0.0
    %166 = vst [vmem:[#allocation7] sm:$0xff] %v164
    %167 = vst [vmem:[#allocation7 + $0x8] sm:$0xff] %v165
    // Predicated region
    $region22: #{tpu_custom_call.1} parent=1 // pred_check
      _
    $region23: #{tpu_custom_call.1} parent=1 // pred_check_branch
      %169 = sbr.rel (0) target = $region25
    $region24: #{tpu_custom_call.1} parent=1 // pred_region
      %s171 = ssub.s32 256, 256
      %172 = vsyncadd [#allocation4], %s171
      %s173 = sshll.u32 [#allocation7], 4
      %s174 = int_to_ptr.vmem [resolvable:$true] %s173
      %179 = dma.vmem_to_hbm [thread:$0]  %s174, 256, %s3, [#allocation4], 128, 128, 8
    $region25: #{tpu_custom_call.1} parent=1 // pred_fallthru
      _
    // Predicated region
    $region26: #{tpu_custom_call.1} parent=1 // pred_check
      _
    $region27: #{tpu_custom_call.1} parent=1 // pred_check_branch
      %181 = sbr.rel (0) target = $region29
    $region28: #{tpu_custom_call.1} parent=1 // pred_region
      %182 = dma.done [#allocation4], 256
    $region29: #{tpu_custom_call.1} parent=1 // pred_fallthru
      _
    %183 = vsyncpa [#allocation3], 1
    %184 = vsyncpa [#allocation6], 1
    %185 = vsyncpa [#allocation4], 1

</llo_original>
